<compile_context>
chip_gen: v6e
topology: v6e:2x2x1
jax: 0.10.0
libtpu: 0.0.40
codegen_flags: <defaults>
</compile_context>

<pallas_src>
import functools

import jax
import jax.numpy as jnp
from jax.experimental import pallas as pl
from jax.experimental.pallas import tpu as pltpu


def _round_up(x, m):
    return ((x + m - 1) // m) * m


def _round_down(x, m):
    return (x // m) * m


def _split_kernel(p: int, d: int, x_ref, prob_ref, mean_ref, cov_ref):
    """Per row-tile: split the feature axis [prob | mean | cov].

    Slices the Ref directly (no `x = x_ref[...]` of the whole 640-lane padded
    tile), so only the lanes each output needs are loaded.  mean/cov stores
    are lane-dense (p*d = 256 = 2*128 lanes) unmasked vst; prob is a small
    (p = 8 lane) masked store, <2% of the bytes, hidden under the DMA streams.

    NOTE(layout): the column offsets p (=8) and p*(1+d) are not multiples of
    128 lanes, so the mean/cov loads imply an in-VMEM lane realignment (extra
    vld + XLU shift per vreg).  Removing that would require the producer to
    emit [mean | cov | prob]; the module's layout is fixed and the kernel is
    HBM-bound, so this stays.
    """
    prob_ref[...] = x_ref[:, :p]
    mean_ref[...] = x_ref[:, p : p * (1 + d)]
    cov_ref[...] = x_ref[:, p * (1 + d) :]


def _tpu_config():
    """Per-generation (vmem_limit_bytes, row_tile_cap, row_dim_semantics)."""
    kind = ""
    try:
        kind = jax.devices()[0].device_kind.lower()
    except Exception:  # pragma: no cover - defensive, fall through to defaults
        pass
    is_v7x = ("v7" in kind) or ("7x" in kind)
    known_128mib = any(tag in kind for tag in ("v4", "v5", "v6"))

    if is_v7x or not known_128mib:
        # v7x: 64 MiB VMEM per TensorCore -> 48 MiB limit is the ceiling,
        # not a floor; keep ~8 MiB headroom for internal scratch below it.
        # Also the conservative default when the generation is unknown.
        vmem_limit = 48 << 20
        row_cap = 4096
        # Guarantee the 1-D row grid actually shards across both TCs on v7x.
        row_sem = getattr(pltpu, "CORE_PARALLEL", "parallel") if is_v7x else "parallel"
    else:
        # v4/v5e/v6e: 128 MiB physical VMEM -> bigger tiles, fewer grid steps
        # (per-step overhead ~0.35 us).
        vmem_limit = 96 << 20
        row_cap = 8192
        row_sem = "parallel"
    return vmem_limit, row_cap, row_sem


def prototype_tokenizer(X, *, proto_model_type="PANTHER", out_type="allcat",
                        p=8, block_rows=None):
    """JAX/Pallas equivalent of PrototypeTokenizer.forward.

    block_rows=None -> auto-select the row tile per TPU generation / VMEM.
    """
    if out_type != "allcat":
        raise NotImplementedError(f"Not implemented for {out_type}")

    n_samples, feat = X.shape

    if proto_model_type == "OT":
        # Constant prob + metadata reshape only: plain JAX glue, no kernel.
        prob = jnp.full((n_samples, p), 1.0 / p, dtype=X.dtype)
        mean = X.reshape(n_samples, p, -1)
        cov = None
        return prob, mean, cov

    if proto_model_type != "PANTHER":
        raise NotImplementedError(f"Not implemented for {proto_model_type}")

    d = (feat - p) // (2 * p)
    assert feat == p + 2 * p * d, (
        f"feature dim {feat} is not p + 2*p*d for p={p} (inferred d={d})")

    # Minimum sublane packing per dtype width: f32 -> 8, bf16/f16 -> 16,
    # int8/fp8 -> 32.
    itemsize = jnp.dtype(X.dtype).itemsize
    sublane = {4: 8, 2: 16, 1: 32}.get(itemsize, 8)

    vmem_limit, row_cap, row_sem = _tpu_config()

    # Double-buffered VMEM bytes per row, INCLUDING the lane padding each
    # block picks up in VMEM: input feat 520 -> 640 lanes, prob 8 -> 128
    # lanes, mean/cov already lane-dense multiples of 128.
    bytes_per_row = (
        _round_up(feat, 128) + 2 * _round_up(p * d, 128) + _round_up(p, 128)
    ) * itemsize
    # Leave ~8 MiB under vmem_limit for Mosaic internal scratch.
    budget_rows = max((vmem_limit - (8 << 20)) // (2 * bytes_per_row), sublane)

    want = row_cap if block_rows is None else block_rows
    tn = min(want, budget_rows, row_cap)
    tn = max(_round_down(tn, sublane), sublane)
    if n_samples <= tn:
        tn = n_samples  # full row extent is always a legal block shape
    num_blocks = pl.cdiv(n_samples, tn)

    kernel = functools.partial(_split_kernel, p, d)

    prob, mean_flat, cov_flat = pl.pallas_call(
        kernel,
        out_shape=(
            jax.ShapeDtypeStruct((n_samples, p), X.dtype),
            jax.ShapeDtypeStruct((n_samples, p * d), X.dtype),
            jax.ShapeDtypeStruct((n_samples, p * d), X.dtype),
        ),
        grid_spec=pl.GridSpec(
            grid=(num_blocks,),
            in_specs=[pl.BlockSpec((tn, feat), lambda i: (i, 0))],
            out_specs=(
                pl.BlockSpec((tn, p), lambda i: (i, 0)),
                pl.BlockSpec((tn, p * d), lambda i: (i, 0)),
                pl.BlockSpec((tn, p * d), lambda i: (i, 0)),
            ),
        ),
        compiler_params=pltpu.CompilerParams(
            dimension_semantics=(row_sem,),
            vmem_limit_bytes=vmem_limit,
        ),
    )(X)

    # (N, p*d) -> (N, p, d): metadata glue done in JAX.
    # TODO(synk): verify in HLO that these reshapes lower to bitcasts (minor
    # dim d=32 < 128 lanes); if XLA materializes a relayout, return the flat
    # arrays and reshape at / fuse into the consumer instead.
    mean = mean_flat.reshape(n_samples, p, d)
    cov = cov_flat.reshape(n_samples, p, d)
    return prob, mean, cov


def _reference(X, p):
    """Pure-JAX reference mirroring the PyTorch forward exactly."""
    d = (X.shape[1] - p) // (2 * p)
    prob = X[:, :p]
    mean = X[:, p : p * (1 + d)].reshape(-1, p, d)
    cov = X[:, p * (1 + d):].reshape(-1, p, d)
    return prob, mean, cov


if __name__ == "__main__":
    P, D = 8, 32
    F = P + 2 * P * D  # 520 = prob(8) + mean(256) + cov(256)

    key = jax.random.PRNGKey(0)
    k1, k2 = jax.random.split(key)

    # Case 1: multi-step grid with a ragged last row block (N not a multiple
    # of the row tile) to exercise the pipelined path.
    N1 = 40
    X1 = jax.random.normal(k1, (N1, F), dtype=jnp.float32)
    prob1, mean1, cov1 = prototype_tokenizer(X1, p=P, block_rows=16)
    jax.block_until_ready((prob1, mean1, cov1))
    prob1_r, mean1_r, cov1_r = _reference(X1, P)
    assert prob1.shape == (N1, P) and mean1.shape == (N1, P, D) and cov1.shape == (N1, P, D)
    assert jnp.array_equal(prob1, prob1_r)
    assert jnp.array_equal(mean1, mean1_r)
    assert jnp.array_equal(cov1, cov1_r)

    # Case 2: tiny batch, auto tile size (single full-array block).
    N2 = 4
    X2 = jax.random.normal(k2, (N2, F), dtype=jnp.float32)
    prob2, mean2, cov2 = prototype_tokenizer(X2, p=P)
    jax.block_until_ready((prob2, mean2, cov2))
    prob2_r, mean2_r, cov2_r = _reference(X2, P)
    assert jnp.array_equal(prob2, prob2_r)
    assert jnp.array_equal(mean2, mean2_r)
    assert jnp.array_equal(cov2, cov2_r)

    # Case 3: OT branch (plain-JAX path of the module).
    X3 = X2[:, : P * D]
    prob3, mean3, cov3 = prototype_tokenizer(X3, proto_model_type="OT", p=P)
    jax.block_until_ready((prob3, mean3))
    assert cov3 is None
    assert jnp.array_equal(prob3, jnp.full((N2, P), 1.0 / P, dtype=X3.dtype))
    assert jnp.array_equal(mean3, X3.reshape(N2, P, -1))

    print("KERNEL_OK")
</pallas_src>

<mosaic_0001>
module attributes {stable_mosaic.version = 11 : i64} {
  func.func @_split_kernel(%arg0: i32, %arg1: memref<16x520xf32, #tpu.memory_space<vmem>>, %arg2: memref<16x8xf32, #tpu.memory_space<vmem>>, %arg3: memref<16x256xf32, #tpu.memory_space<vmem>>, %arg4: memref<16x256xf32, #tpu.memory_space<vmem>>) attributes {dimension_semantics = [#tpu.dimension_semantics<parallel>], iteration_bounds = array<i64: 3>, scalar_prefetch = 0 : i64, scratch_operands = 0 : i64, tpu.core_type = #tpu.core_type<tc>, window_params = [{transform_indices = @transform_0, window_bounds = array<i64: 16, 520>}, {transform_indices = @transform_1, window_bounds = array<i64: 16, 8>}, {transform_indices = @transform_2, window_bounds = array<i64: 16, 256>}, {transform_indices = @transform_3, window_bounds = array<i64: 16, 256>}]} {
    %c0 = arith.constant 0 : index
    %c0_0 = arith.constant 0 : index
    %0 = vector.load %arg1[%c0, %c0_0] : memref<16x520xf32, #tpu.memory_space<vmem>>, vector<16x8xf32>
    %c0_1 = arith.constant 0 : index
    %c0_2 = arith.constant 0 : index
    %1 = vector.load %arg2[%c0_1, %c0_2] : memref<16x8xf32, #tpu.memory_space<vmem>>, vector<16x8xf32>
    tpu.vector_store %arg2[%c0_1, %c0_2], %0 {strides = array<i32>} : memref<16x8xf32, #tpu.memory_space<vmem>>, vector<16x8xf32>,
    %c0_3 = arith.constant 0 : index
    %c8 = arith.constant 8 : index
    %2 = vector.load %arg1[%c0_3, %c8] : memref<16x520xf32, #tpu.memory_space<vmem>>, vector<16x256xf32>
    %c0_4 = arith.constant 0 : index
    %c0_5 = arith.constant 0 : index
    %3 = vector.load %arg3[%c0_4, %c0_5] : memref<16x256xf32, #tpu.memory_space<vmem>>, vector<16x256xf32>
    tpu.vector_store %arg3[%c0_4, %c0_5], %2 {strides = array<i32>} : memref<16x256xf32, #tpu.memory_space<vmem>>, vector<16x256xf32>,
    %c0_6 = arith.constant 0 : index
    %c264 = arith.constant 264 : index
    %4 = vector.load %arg1[%c0_6, %c264] : memref<16x520xf32, #tpu.memory_space<vmem>>, vector<16x256xf32>
    %c0_7 = arith.constant 0 : index
    %c0_8 = arith.constant 0 : index
    %5 = vector.load %arg4[%c0_7, %c0_8] : memref<16x256xf32, #tpu.memory_space<vmem>>, vector<16x256xf32>
    tpu.vector_store %arg4[%c0_7, %c0_8], %4 {strides = array<i32>} : memref<16x256xf32, #tpu.memory_space<vmem>>, vector<16x256xf32>,
    return
  }
  func.func @transform_0(%arg0: i32) -> (i32, i32) {
    %c0_i32 = arith.constant 0 : i32
    %c0_i32_0 = arith.constant 0 : i32
    return %arg0, %c0_i32 : i32, i32
  }
  func.func @transform_1(%arg0: i32) -> (i32, i32) {
    %c0_i32 = arith.constant 0 : i32
    %c0_i32_0 = arith.constant 0 : i32
    return %arg0, %c0_i32 : i32, i32
  }
  func.func @transform_2(%arg0: i32) -> (i32, i32) {
    %c0_i32 = arith.constant 0 : i32
    %c0_i32_0 = arith.constant 0 : i32
    return %arg0, %c0_i32 : i32, i32
  }
  func.func @transform_3(%arg0: i32) -> (i32, i32) {
    %c0_i32 = arith.constant 0 : i32
    %c0_i32_0 = arith.constant 0 : i32
    return %arg0, %c0_i32 : i32, i32
  }
}

</mosaic_0001>

<llo_original>
// kernel: tpu_custom_call.1
$region0: #{tpu_custom_call.1}
  #allocation0 [shape = 'u32[]', space=smem, size = 0x4, offset = 0x4, fixed_abs, tag = 'smem constant byte address 0x4 - core index']
  #allocation1 [shape = 'u32[144,128]{1,0:T(1,128)}', space=vmem, size = 0x12000, scoped, tag = 'internal scratch']
  %s0 = inlined_call_operand.hbm [shape: f32[40,520], index: 0, kind: input, shape index: {}]
  %s1 = inlined_call_operand.vmem [shape: f32[40,8], index: 1, kind: output, shape index: {0}]
  %s2 = inlined_call_operand.hbm [shape: f32[40,256], index: 2, kind: output, shape index: {1}]
  %s3 = inlined_call_operand.hbm [shape: f32[40,256], index: 3, kind: output, shape index: {2}]
  %4 = xla_tuple %s1, %s2, %s3
  %s5 = sld [smem:[#allocation0]]
  $region105: #{tpu_custom_call.1} parent=0
    _
  %s7 = ssub.s32 1, %s5
  %s8 = scalar_select 0, %s7, %s5
  $region1: #{tpu_custom_call.1} parent=0
    #allocation2 [shape = 'u8[81920]{0}', space=vmem, size = 0x14000, scoped, tag = 'input window, operand 0']
    #allocation3 [shape = 's32[2]{0}', space=sflag, size = 0x8, scoped, tag = 'scoped memory for tpu_custom_call.1']
    #allocation4 [shape = 's32[2]{0}', space=sflag, size = 0x8, scoped, tag = 'scoped memory for tpu_custom_call.1']
    #allocation5 [shape = 'u8[16384]{0}', space=vmem, size = 0x4000, scoped, tag = 'output window, operand 0']
    #allocation6 [shape = 'u8[32768]{0}', space=vmem, size = 0x8000, scoped, tag = 'output window, operand 1']
    #allocation7 [shape = 'u8[32768]{0}', space=vmem, size = 0x8000, scoped, tag = 'output window, operand 2']
    #allocation8 [shape = 's32[2]{0}', space=sflag, size = 0x8, scoped, tag = 'scoped memory for tpu_custom_call.1']
    %9 = vsyncpa [#allocation3], 0
    %s10 = scalar_lea.sflag [#allocation3], 1
    %11 = vsyncpa %s10, 0
    %12 = vsyncpa [#allocation4], 0
    %s13 = scalar_lea.sflag [#allocation4], 1
    %14 = vsyncpa %s13, 0
    %15 = vsyncpa [#allocation8], 0
    %s16 = scalar_lea.sflag [#allocation8], 1
    %17 = vsyncpa %s16, 0
    loop: start=0, step=1, limit=5
    $region2: #{tpu_custom_call.1} parent=1 // loop_pre_header
      _
    $region3: #{tpu_custom_call.1} parent=1 // loop_header
      %s19 = sphi 0, %s23
      %p20 = scmp.ge.s32.totalorder %s19, 5
      %s29 = sphi 0, %s31
      %s32 = sphi 0, %s29
      %s33 = sphi 0, %s32
      %s49 = sphi 0, %s33
      %s55 = sphi 0, %s57
      %s58 = sphi 0, %s55
      %s59 = sphi 0, %s58
      %s75 = sphi 0, %s59
      %s81 = sphi 0, %s83
      %s84 = sphi 0, %s81
      %s85 = sphi 0, %s84
      %s101 = sphi 0, %s85
      %s107 = sphi 0, %s109
      %s110 = sphi 0, %s107
      %s111 = sphi 0, %s110
      %s127 = sphi 0, %s111
    $region4: #{tpu_custom_call.1} parent=1 // loop_header_branch
      %22 = sbr.rel (%p20) target = $region8
    $region5: #{tpu_custom_call.1} parent=1 // loop_body
      %s24 = ssub.s32 %s19, 1
      %s25 = ssub.s32 %s19, 2
      %s26 = sadd.s32 %s19, 1
      %s27 = ssub.s32 %s19, %s26
      %p28 = scmp.eq.s32.totalorder %s27, 0
      %s30 = sadd.s32 %s29, 1
      %s31 = scalar_select %p28, %s29, %s30
      %p34 = pneg %p28
      %p35 = scmp.eq.s32.totalorder %s19, 2
      %p36 = por %p34, %p35
      %p37 = scmp.ne.s32.totalorder %s29, %s32
      %p38 = scmp.eq.s32.totalorder %s19, 0
      %p39 = por %p37, %p38
      %p40 = scmp.ne.s32.totalorder %s29, %s32
      %p41 = scmp.eq.s32.totalorder %s24, 2
      %p42 = por %p40, %p41
      %p43 = scmp.ne.s32.totalorder %s32, %s33
      %p44 = scmp.eq.s32.totalorder %s24, 0
      %p45 = por %p43, %p44
      %p46 = scmp.ne.s32.totalorder %s32, %s33
      %p47 = scmp.eq.s32.totalorder %s25, 2
      %p48 = por %p46, %p47
      %p50 = scmp.ne.s32.totalorder %s33, %s49
      %p51 = scmp.eq.s32.totalorder %s25, 0
      %p52 = por %p50, %p51
      %s53 = ssub.s32 %s19, %s26
      %p54 = scmp.eq.s32.totalorder %s53, 0
      %s56 = sadd.s32 %s55, 1
      %s57 = scalar_select %p54, %s55, %s56
      %p60 = pneg %p54
      %p61 = scmp.eq.s32.totalorder %s19, 2
      %p62 = por %p60, %p61
      %p63 = scmp.ne.s32.totalorder %s55, %s58
      %p64 = scmp.eq.s32.totalorder %s19, 0
      %p65 = por %p63, %p64
      %p66 = scmp.ne.s32.totalorder %s55, %s58
      %p67 = scmp.eq.s32.totalorder %s24, 2
      %p68 = por %p66, %p67
      %p69 = scmp.ne.s32.totalorder %s58, %s59
      %p70 = scmp.eq.s32.totalorder %s24, 0
      %p71 = por %p69, %p70
      %p72 = scmp.ne.s32.totalorder %s58, %s59
      %p73 = scmp.eq.s32.totalorder %s25, 2
      %p74 = por %p72, %p73
      %p76 = scmp.ne.s32.totalorder %s59, %s75
      %p77 = scmp.eq.s32.totalorder %s25, 0
      %p78 = por %p76, %p77
      %s79 = ssub.s32 %s19, %s26
      %p80 = scmp.eq.s32.totalorder %s79, 0
      %s82 = sadd.s32 %s81, 1
      %s83 = scalar_select %p80, %s81, %s82
      %p86 = pneg %p80
      %p87 = scmp.eq.s32.totalorder %s19, 2
      %p88 = por %p86, %p87
      %p89 = scmp.ne.s32.totalorder %s81, %s84
      %p90 = scmp.eq.s32.totalorder %s19, 0
      %p91 = por %p89, %p90
      %p92 = scmp.ne.s32.totalorder %s81, %s84
      %p93 = scmp.eq.s32.totalorder %s24, 2
      %p94 = por %p92, %p93
      %p95 = scmp.ne.s32.totalorder %s84, %s85
      %p96 = scmp.eq.s32.totalorder %s24, 0
      %p97 = por %p95, %p96
      %p98 = scmp.ne.s32.totalorder %s84, %s85
      %p99 = scmp.eq.s32.totalorder %s25, 2
      %p100 = por %p98, %p99
      %p102 = scmp.ne.s32.totalorder %s85, %s101
      %p103 = scmp.eq.s32.totalorder %s25, 0
      %p104 = por %p102, %p103
      %s105 = ssub.s32 %s19, %s26
      %p106 = scmp.eq.s32.totalorder %s105, 0
      %s108 = sadd.s32 %s107, 1
      %s109 = scalar_select %p106, %s107, %s108
      %p112 = pneg %p106
      %p113 = scmp.eq.s32.totalorder %s19, 2
      %p114 = por %p112, %p113
      %p115 = scmp.ne.s32.totalorder %s107, %s110
      %p116 = scmp.eq.s32.totalorder %s19, 0
      %p117 = por %p115, %p116
      %p118 = scmp.ne.s32.totalorder %s107, %s110
      %p119 = scmp.eq.s32.totalorder %s24, 2
      %p120 = por %p118, %p119
      %p121 = scmp.ne.s32.totalorder %s110, %s111
      %p122 = scmp.eq.s32.totalorder %s24, 0
      %p123 = por %p121, %p122
      %p124 = scmp.ne.s32.totalorder %s110, %s111
      %p125 = scmp.eq.s32.totalorder %s25, 2
      %p126 = por %p124, %p125
      %p128 = scmp.ne.s32.totalorder %s111, %s127
      %p129 = scmp.eq.s32.totalorder %s25, 0
      %p130 = por %p128, %p129
      %p131 = scmp.le.s32.totalorder 1, %s19
      %p132 = scmp.lt.s32.totalorder %s19, 4
      %p133 = pnand %p131, %p132
      %p134 = pneg %p133
      // Predicated region
      $region9: #{tpu_custom_call.1} parent=5 // pred_check
        _
      $region10: #{tpu_custom_call.1} parent=5 // pred_check_branch
        %136 = sbr.rel (%p133) target = $region12
      $region11: #{tpu_custom_call.1} parent=5 // pred_region
        %s137 = ssub.s32 %s19, 1
      $region12: #{tpu_custom_call.1} parent=5 // pred_fallthru
        _
      %p138 = scmp.lt.s32.totalorder %s19, 3
      // Predicated region
      $region13: #{tpu_custom_call.1} parent=5 // pred_check
        %p139 = pneg %p138
      $region14: #{tpu_custom_call.1} parent=5 // pred_check_branch
        %141 = sbr.rel (%p139) target = $region16
      $region15: #{tpu_custom_call.1} parent=5 // pred_region
        // Predicated region
        $region17: #{tpu_custom_call.1} parent=15 // pred_check
          %p142 = pneg %p39
        $region18: #{tpu_custom_call.1} parent=15 // pred_check_branch
          %144 = sbr.rel (%p142) target = $region20
        $region19: #{tpu_custom_call.1} parent=15 // pred_region
          %s145 = sand.u32 %s29, 1
          %s146 = scalar_lea.sflag [#allocation3], %s145
          %s147 = sand.u32 %s29, 1
          %s148 = smul.addr %s147, 80
          %s149 = scalar_lea.vmem [#allocation2], %s148
          %s150 = smul.u32 2, %s19
          %s151 = ssub.s32 5, %s150
          %p152 = scmp.lt.s32.totalorder %s151, 2
          %s153 = scalar_select %p152, %s151, 2
          %s154 = smul.u32 128, %s153
          %s155 = smul.u32 %s154, 5
          %s157 = ssub.s32 1280, %s155
          %158 = vsyncadd %s146, %s157
          %p159 = scmp.ne.s32.totalorder 0, %s155
          %s160 = smul.addr %s150, 5
          %s161 = smul.addr %s160, 128
          %s162 = scalar_lea.hbm %s0, %s161
          %s163 = smul.u32 40, %s153
          %s164 = sshll.u32 %s149, 4
          %s165 = int_to_ptr.vmem [resolvable:$true] %s164
          %s166 = sshll.u32 %s163, 4
          %170 = dma.hbm_to_vmem [thread:$0]  (%p159), %s162, %s166, %s165, %s146, 640, 640, 40
        $region20: #{tpu_custom_call.1} parent=15 // pred_fallthru
          _
      $region16: #{tpu_custom_call.1} parent=5 // pred_fallthru
        _
      %p171 = scmp.le.s32.totalorder 1, %s19
      %p172 = scmp.lt.s32.totalorder %s19, 4
      %p173 = pnand %p171, %p172
      %p174 = pneg %p173
      // Predicated region
      $region21: #{tpu_custom_call.1} parent=5 // pred_check
        _
      $region22: #{tpu_custom_call.1} parent=5 // pred_check_branch
        %176 = sbr.rel (%p173) target = $region24
      $region23: #{tpu_custom_call.1} parent=5 // pred_region
        %s177 = ssub.s32 %s19, 1
        %s178 = sand.u32 %s32, 1
        %s179 = scalar_lea.sflag [#allocation3], %s178
        %s180 = sand.u32 %s32, 1
        %s181 = smul.addr %s180, 80
        %s182 = scalar_lea.vmem [#allocation2], %s181
        // Predicated region
        $region25: #{tpu_custom_call.1} parent=23 // pred_check
          %p183 = pneg %p45
        $region26: #{tpu_custom_call.1} parent=23 // pred_check_branch
          %185 = sbr.rel (%p183) target = $region28
        $region27: #{tpu_custom_call.1} parent=23 // pred_region
          %186 = dma.done %s179, 1280
        $region28: #{tpu_custom_call.1} parent=23 // pred_fallthru
          _
        %s187 = sand.u32 %s32, 1
        %s188 = scalar_lea.sflag [#allocation3], %s187
        %s189 = sand.u32 %s32, 1
        %s190 = smul.addr %s189, 80
        %s191 = scalar_lea.vmem [#allocation2], %s190
        %p192 = pneg %p45
        %p193 = pneg %p42
        %p194 = pneg %p71
        %p195 = pneg %p68
        %s196 = sand.u32 %s58, 1
        %s197 = sand.u32 %s58, 1
        %s198 = smul.addr %s197, 16
        %s199 = scalar_lea.vmem [#allocation5], %s198
        %p200 = pneg %p97
        %p201 = pneg %p94
        %s202 = sand.u32 %s84, 1
        %s203 = scalar_lea.sflag [#allocation4], %s202
        %s204 = sand.u32 %s84, 1
        %s205 = smul.addr %s204, 32
        %s206 = scalar_lea.vmem [#allocation6], %s205
        %p207 = pneg %p123
        %p208 = pneg %p120
        %s209 = sand.u32 %s110, 1
        %s210 = scalar_lea.sflag [#allocation8], %s209
        %s211 = sand.u32 %s110, 1
        %s212 = smul.addr %s211, 32
        %s213 = scalar_lea.vmem [#allocation7], %s212
        %s214 = smul.u32 2, %s24
        %s215 = ssub.s32 5, %s214
        %p216 = scmp.lt.s32.totalorder %s215, 2
        %s217 = scalar_select %p216, %s215, 2
        %s218 = smul.u32 128, %s217
        %s219 = smul.u32 %s218, 5
        %s220 = smul.u32 2, %s24
        %s221 = ssub.s32 5, %s220
        %p222 = scmp.lt.s32.totalorder %s221, 2
        %s223 = scalar_select %p222, %s221, 2
        %s224 = smul.u32 128, %s223
        %s225 = smul.u32 2, %s24
        %s226 = ssub.s32 5, %s225
        %p227 = scmp.lt.s32.totalorder %s226, 2
        %s228 = scalar_select %p227, %s226, 2
        %s229 = smul.u32 128, %s228
        %s230 = smul.u32 %s229, 2
        %s231 = smul.u32 2, %s24
        %s232 = ssub.s32 5, %s231
        %p233 = scmp.lt.s32.totalorder %s232, 2
        %s234 = scalar_select %p233, %s232, 2
        %s235 = smul.u32 128, %s234
        %s236 = smul.u32 %s235, 2
        %v237 = vld [vmem:[%s182] sm:$0xff]
        %v238 = vld [vmem:[%s182 + $0x28] sm:$0xff]
        %vm239 = vcmask 64512
        %240 = vst.msk [vmem:[%s199] sm:$0xff] %vm239, %v237
        %241 = vst.msk [vmem:[%s199 + $0x8] sm:$0xff] %vm239, %v238
        %v242 = vld [vmem:[%s182] sm:$0xff]
        %v243 = vld [vmem:[%s182 + $0x8] sm:$0xff]
        %v244 = vld [vmem:[%s182 + $0x10] sm:$0xff]
        %v245 = vld [vmem:[%s182 + $0x28] sm:$0xff]
        %v246 = vld [vmem:[%s182 + $0x30] sm:$0xff]
        %v247 = vld [vmem:[%s182 + $0x38] sm:$0xff]
        %254 = vrot.lane.b32.xlu0 %v242, 120
        %v255 = vpop.permute.xlu0 %254
        %256 = vrot.lane.b32.xlu0 %v243, 120
        %v257 = vpop.permute.xlu0 %256
        %258 = vrot.lane.b32.xlu0 %v244, 120
        %v259 = vpop.permute.xlu0 %258
        %260 = vrot.lane.b32.xlu0 %v245, 120
        %v261 = vpop.permute.xlu0 %260
        %262 = vrot.lane.b32.xlu0 %v246, 120
        %v263 = vpop.permute.xlu0 %262
        %264 = vrot.lane.b32.xlu0 %v247, 120
        %v265 = vpop.permute.xlu0 %264
        %vm266 = vcmask 982016
        %v267 = vsel %vm266, %v255, %v257
        %v268 = vsel %vm266, %v257, %v259
        %v269 = vsel %vm266, %v261, %v263
        %v270 = vsel %vm266, %v263, %v265
        %275 = vst [vmem:[%s206] sm:$0xff] %v267
        %276 = vst [vmem:[%s206 + $0x8] sm:$0xff] %v268
        %277 = vst [vmem:[%s206 + $0x10] sm:$0xff] %v269
        %278 = vst [vmem:[%s206 + $0x18] sm:$0xff] %v270
        %v279 = vld [vmem:[%s182 + $0x10] sm:$0xff]
        %v280 = vld [vmem:[%s182 + $0x18] sm:$0xff]
        %v281 = vld [vmem:[%s182 + $0x20] sm:$0xff]
        %v282 = vld [vmem:[%s182 + $0x38] sm:$0xff]
        %v283 = vld [vmem:[%s182 + $0x40] sm:$0xff]
        %v284 = vld [vmem:[%s182 + $0x48] sm:$0xff]
        %291 = vrot.lane.b32.xlu0 %v279, 120
        %v292 = vpop.permute.xlu0 %291
        %293 = vrot.lane.b32.xlu0 %v280, 120
        %v294 = vpop.permute.xlu0 %293
        %295 = vrot.lane.b32.xlu0 %v281, 120
        %v296 = vpop.permute.xlu0 %295
        %297 = vrot.lane.b32.xlu0 %v282, 120
        %v298 = vpop.permute.xlu0 %297
        %299 = vrot.lane.b32.xlu0 %v283, 120
        %v300 = vpop.permute.xlu0 %299
        %301 = vrot.lane.b32.xlu0 %v284, 120
        %v302 = vpop.permute.xlu0 %301
        %v303 = vsel %vm266, %v292, %v294
        %v304 = vsel %vm266, %v294, %v296
        %v305 = vsel %vm266, %v298, %v300
        %v306 = vsel %vm266, %v300, %v302
        %311 = vst [vmem:[%s213] sm:$0xff] %v303
        %312 = vst [vmem:[%s213 + $0x8] sm:$0xff] %v304
        %313 = vst [vmem:[%s213 + $0x10] sm:$0xff] %v305
        %314 = vst [vmem:[%s213 + $0x18] sm:$0xff] %v306
        %s315 = sand.u32 %s58, 1
        %s316 = sand.u32 %s58, 1
        %s317 = smul.addr %s316, 16
        %s318 = scalar_lea.vmem [#allocation5], %s317
        %s319 = sand.u32 %s84, 1
        %s320 = scalar_lea.sflag [#allocation4], %s319
        %s321 = sand.u32 %s84, 1
        %s322 = smul.addr %s321, 32
        %s323 = scalar_lea.vmem [#allocation6], %s322
        %s324 = sand.u32 %s110, 1
        %s325 = scalar_lea.sflag [#allocation8], %s324
        %s326 = sand.u32 %s110, 1
        %s327 = smul.addr %s326, 32
        %s328 = scalar_lea.vmem [#allocation7], %s327
        // Predicated region
        $region29: #{tpu_custom_call.1} parent=23 // pred_check
          %p329 = pneg %p68
        $region30: #{tpu_custom_call.1} parent=23 // pred_check_branch
          %331 = sbr.rel (%p329) target = $region32
        $region31: #{tpu_custom_call.1} parent=23 // pred_region
          %s332 = smul.u32 2, %s24
          %s333 = ssub.s32 5, %s332
          %p334 = scmp.lt.s32.totalorder %s333, 2
          %s335 = scalar_select %p334, %s333, 2
          %s336 = smul.u32 128, %s335
          %p337 = scmp.ne.s32.totalorder 0, %s336
          %s338 = smul.addr %s332, 8
          %s339 = scalar_lea.vmem %s1, %s338
          // Predicated region
          $region33: #{tpu_custom_call.1} parent=31 // pred_check
            %p340 = pneg %p337
          $region34: #{tpu_custom_call.1} parent=31 // pred_check_branch
            %342 = sbr.rel (%p340) target = $region36
          $region35: #{tpu_custom_call.1} parent=31 // pred_region
            // Predicated region
            $region37: #{tpu_custom_call.1} parent=35 // pred_check
              _
            $region38: #{tpu_custom_call.1} parent=35 // pred_check_branch
              %344 = sbr.rel (0) target = $region40
            $region39: #{tpu_custom_call.1} parent=35 // pred_region
              // Predicated region
              $region59: #{tpu_custom_call.1} parent=39 // pred_check
                _
              $region60: #{tpu_custom_call.1} parent=39 // pred_check_branch
                %396 = sbr.rel (0) target = $region62
              $region61: #{tpu_custom_call.1} parent=39 // pred_region
                %s397 = sshrl.u32 %s335, 1
                // While loop
                $region63: #{tpu_custom_call.1} parent=61 // loop_pre_header
                  _
                $region64: #{tpu_custom_call.1} parent=61 // loop_header
                  %s399 = sphi 0, %s401
                  %p400 = scmp.ge.s32.totalorder %s399, %s397
                  %s404 = sphi 0, %s413
                  %s405 = sphi %s318, %s416
                  %s406 = sphi %s339, %s417
                $region65: #{tpu_custom_call.1} parent=61 // loop_header_branch
                  %403 = sbr.rel (%p400) target = $region69
                $region66: #{tpu_custom_call.1} parent=61 // loop_body
                  %v407 = vld [vmem:[%s405] sm:$0xff]
                  %408 = vst [vmem:[%s406] sm:$0xff] %v407
                  %v409 = vld [vmem:[%s405 + $0x8] sm:$0xff]
                  %410 = vst [vmem:[%s406 + $0x8] sm:$0xff] %v409
                  %s411 = sadd.s32 1, %s404
                  %p412 = scmp.ge.s32.totalorder %s411, %s397
                  %s413 = scalar_select %p412, 0, %s411
                  %s414 = smul.u32 %s413, 16
                  %s415 = smul.u32 %s413, 16
                  %s416 = scalar_lea.vmem %s318, %s414 [#allocation5]
                  %s417 = scalar_lea.vmem %s339, %s415
                $region67: #{tpu_custom_call.1} parent=61 // loop_footer
                  %s401 = sadd.s32 %s399, 1
                $region68: #{tpu_custom_call.1} parent=61 // loop_footer_branch
                  %398 = sbr.rel target = $region64
                $region69: #{tpu_custom_call.1} parent=61 // loop_exit
                  _
                %s418 = sshrl.u32 %s335, 1
                %s419 = sand.u32 %s335, 1
                %s420 = smul.u32 %s418, 2
                %s421 = smul.u32 8, %s420
                %s422 = scalar_lea.vmem %s318, %s421 [#allocation5]
                %s423 = smul.u32 8, %s420
                %s424 = scalar_lea.vmem %s339, %s423
                // While loop
                $region70: #{tpu_custom_call.1} parent=61 // loop_pre_header
                  _
                $region71: #{tpu_custom_call.1} parent=61 // loop_header
                  %s426 = sphi 0, %s428
                  %p427 = scmp.ge.s32.totalorder %s426, %s419
                  %s431 = sphi 0, %s438
                  %s432 = sphi %s422, %s441
                  %s433 = sphi %s424, %s442
                $region72: #{tpu_custom_call.1} parent=61 // loop_header_branch
                  %430 = sbr.rel (%p427) target = $region76
                $region73: #{tpu_custom_call.1} parent=61 // loop_body
                  %v434 = vld [vmem:[%s432] sm:$0xff]
                  %435 = vst [vmem:[%s433] sm:$0xff] %v434
                  %s436 = sadd.s32 1, %s431
                  %p437 = scmp.ge.s32.totalorder %s436, %s419
                  %s438 = scalar_select %p437, 0, %s436
                  %s439 = smul.u32 %s438, 8
                  %s440 = smul.u32 %s438, 8
                  %s441 = scalar_lea.vmem %s422, %s439 [#allocation5]
                  %s442 = scalar_lea.vmem %s424, %s440
                $region74: #{tpu_custom_call.1} parent=61 // loop_footer
                  %s428 = sadd.s32 %s426, 1
                $region75: #{tpu_custom_call.1} parent=61 // loop_footer_branch
                  %425 = sbr.rel target = $region71
                $region76: #{tpu_custom_call.1} parent=61 // loop_exit
                  _
              $region62: #{tpu_custom_call.1} parent=39 // pred_fallthru
                _
              // Predicated region
              $region77: #{tpu_custom_call.1} parent=39 // pred_check
                _
              $region78: #{tpu_custom_call.1} parent=39 // pred_check_branch
                %444 = sbr.rel target = $region80
              $region79: #{tpu_custom_call.1} parent=39 // pred_region
                _
              $region80: #{tpu_custom_call.1} parent=39 // pred_fallthru
                _
            $region40: #{tpu_custom_call.1} parent=35 // pred_fallthru
              _
            // Predicated region
            $region41: #{tpu_custom_call.1} parent=35 // pred_check
              _
            $region42: #{tpu_custom_call.1} parent=35 // pred_check_branch
              %346 = sbr.rel target = $region44
            $region43: #{tpu_custom_call.1} parent=35 // pred_region
              %s348 = ssub.s32 256, 1
              %s349 = sshrl.u32 %s335, 1
              // While loop
              $region45: #{tpu_custom_call.1} parent=43 // loop_pre_header
                _
              $region46: #{tpu_custom_call.1} parent=43 // loop_header
                %s351 = sphi 0, %s353
                %p352 = scmp.ge.s32.totalorder %s351, %s349
                %s356 = sphi 0, %s365
                %s357 = sphi %s318, %s368
                %s358 = sphi %s339, %s369
              $region47: #{tpu_custom_call.1} parent=43 // loop_header_branch
                %355 = sbr.rel (%p352) target = $region51
              $region48: #{tpu_custom_call.1} parent=43 // loop_body
                %v359 = vld [vmem:[%s357] sm:%s348]
                %360 = vst [vmem:[%s358] sm:%s348] %v359
                %v361 = vld [vmem:[%s357 + $0x8] sm:%s348]
                %362 = vst [vmem:[%s358 + $0x8] sm:%s348] %v361
                %s363 = sadd.s32 1, %s356
                %p364 = scmp.ge.s32.totalorder %s363, %s349
                %s365 = scalar_select %p364, 0, %s363
                %s366 = smul.u32 %s365, 16
                %s367 = smul.u32 %s365, 16
                %s368 = scalar_lea.vmem %s318, %s366 [#allocation5]
                %s369 = scalar_lea.vmem %s339, %s367
              $region49: #{tpu_custom_call.1} parent=43 // loop_footer
                %s353 = sadd.s32 %s351, 1
              $region50: #{tpu_custom_call.1} parent=43 // loop_footer_branch
                %350 = sbr.rel target = $region46
              $region51: #{tpu_custom_call.1} parent=43 // loop_exit
                _
              %s370 = sshrl.u32 %s335, 1
              %s371 = sand.u32 %s335, 1
              %s372 = smul.u32 %s370, 2
              %s373 = smul.u32 8, %s372
              %s374 = scalar_lea.vmem %s318, %s373 [#allocation5]
              %s375 = smul.u32 8, %s372
              %s376 = scalar_lea.vmem %s339, %s375
              // While loop
              $region52: #{tpu_custom_call.1} parent=43 // loop_pre_header
                _
              $region53: #{tpu_custom_call.1} parent=43 // loop_header
                %s378 = sphi 0, %s380
                %p379 = scmp.ge.s32.totalorder %s378, %s371
                %s383 = sphi 0, %s390
                %s384 = sphi %s374, %s393
                %s385 = sphi %s376, %s394
              $region54: #{tpu_custom_call.1} parent=43 // loop_header_branch
                %382 = sbr.rel (%p379) target = $region58
              $region55: #{tpu_custom_call.1} parent=43 // loop_body
                %v386 = vld [vmem:[%s384] sm:%s348]
                %387 = vst [vmem:[%s385] sm:%s348] %v386
                %s388 = sadd.s32 1, %s383
                %p389 = scmp.ge.s32.totalorder %s388, %s371
                %s390 = scalar_select %p389, 0, %s388
                %s391 = smul.u32 %s390, 8
                %s392 = smul.u32 %s390, 8
                %s393 = scalar_lea.vmem %s374, %s391 [#allocation5]
                %s394 = scalar_lea.vmem %s376, %s392
              $region56: #{tpu_custom_call.1} parent=43 // loop_footer
                %s380 = sadd.s32 %s378, 1
              $region57: #{tpu_custom_call.1} parent=43 // loop_footer_branch
                %377 = sbr.rel target = $region53
              $region58: #{tpu_custom_call.1} parent=43 // loop_exit
                _
            $region44: #{tpu_custom_call.1} parent=35 // pred_fallthru
              _
          $region36: #{tpu_custom_call.1} parent=31 // pred_fallthru
            _
          %445 = vnop
        $region32: #{tpu_custom_call.1} parent=23 // pred_fallthru
          _
        // Predicated region
        $region81: #{tpu_custom_call.1} parent=23 // pred_check
          %p446 = pneg %p94
        $region82: #{tpu_custom_call.1} parent=23 // pred_check_branch
          %448 = sbr.rel (%p446) target = $region84
        $region83: #{tpu_custom_call.1} parent=23 // pred_region
          %s449 = smul.u32 2, %s24
          %s450 = ssub.s32 5, %s449
          %p451 = scmp.lt.s32.totalorder %s450, 2
          %s452 = scalar_select %p451, %s450, 2
          %s453 = smul.u32 128, %s452
          %s454 = smul.u32 %s453, 2
          %s456 = ssub.s32 512, %s454
          %457 = vsyncadd %s320, %s456
          %p458 = scmp.ne.s32.totalorder 0, %s454
          %s459 = smul.addr %s449, 2
          %s460 = smul.addr %s459, 128
          %s461 = scalar_lea.hbm %s2, %s460
          %s462 = smul.u32 16, %s452
          %s463 = sshll.u32 %s323, 4
          %s464 = int_to_ptr.vmem [resolvable:$true] %s463
          %s465 = sshll.u32 %s462, 4
          %469 = dma.vmem_to_hbm [thread:$0]  (%p458), %s464, %s465, %s461, %s320, 256, 256, 16
        $region84: #{tpu_custom_call.1} parent=23 // pred_fallthru
          _
        // Predicated region
        $region85: #{tpu_custom_call.1} parent=23 // pred_check
          %p470 = pneg %p120
        $region86: #{tpu_custom_call.1} parent=23 // pred_check_branch
          %472 = sbr.rel (%p470) target = $region88
        $region87: #{tpu_custom_call.1} parent=23 // pred_region
          %s473 = smul.u32 2, %s24
          %s474 = ssub.s32 5, %s473
          %p475 = scmp.lt.s32.totalorder %s474, 2
          %s476 = scalar_select %p475, %s474, 2
          %s477 = smul.u32 128, %s476
          %s478 = smul.u32 %s477, 2
          %s480 = ssub.s32 512, %s478
          %481 = vsyncadd %s325, %s480
          %p482 = scmp.ne.s32.totalorder 0, %s478
          %s483 = smul.addr %s473, 2
          %s484 = smul.addr %s483, 128
          %s485 = scalar_lea.hbm %s3, %s484
          %s486 = smul.u32 16, %s476
          %s487 = sshll.u32 %s328, 4
          %s488 = int_to_ptr.vmem [resolvable:$true] %s487
          %s489 = sshll.u32 %s486, 4
          %493 = dma.vmem_to_hbm [thread:$0]  (%p482), %s488, %s489, %s485, %s325, 256, 256, 16
        $region88: #{tpu_custom_call.1} parent=23 // pred_fallthru
          _
      $region24: #{tpu_custom_call.1} parent=5 // pred_fallthru
        _
      %p494 = scmp.le.s32.totalorder 2, %s19
      // Predicated region
      $region89: #{tpu_custom_call.1} parent=5 // pred_check
        %p495 = pneg %p494
      $region90: #{tpu_custom_call.1} parent=5 // pred_check_branch
        %497 = sbr.rel (%p495) target = $region92
      $region91: #{tpu_custom_call.1} parent=5 // pred_region
        %s498 = ssub.s32 %s19, 2
        // Predicated region
        $region93: #{tpu_custom_call.1} parent=91 // pred_check
          %p499 = pneg %p74
        $region94: #{tpu_custom_call.1} parent=91 // pred_check_branch
          %501 = sbr.rel (%p499) target = $region96
        $region95: #{tpu_custom_call.1} parent=91 // pred_region
          %s502 = sand.u32 %s59, 1
          %s503 = sand.u32 %s59, 1
          %s504 = smul.addr %s503, 16
          %s505 = scalar_lea.vmem [#allocation5], %s504
        $region96: #{tpu_custom_call.1} parent=91 // pred_fallthru
          _
        // Predicated region
        $region97: #{tpu_custom_call.1} parent=91 // pred_check
          %p506 = pneg %p100
        $region98: #{tpu_custom_call.1} parent=91 // pred_check_branch
          %508 = sbr.rel (%p506) target = $region100
        $region99: #{tpu_custom_call.1} parent=91 // pred_region
          %s509 = sand.u32 %s85, 1
          %s510 = scalar_lea.sflag [#allocation4], %s509
          %s511 = sand.u32 %s85, 1
          %s512 = smul.addr %s511, 32
          %s513 = scalar_lea.vmem [#allocation6], %s512
          %514 = dma.done %s510, 512
        $region100: #{tpu_custom_call.1} parent=91 // pred_fallthru
          _
        // Predicated region
        $region101: #{tpu_custom_call.1} parent=91 // pred_check
          %p515 = pneg %p126
        $region102: #{tpu_custom_call.1} parent=91 // pred_check_branch
          %517 = sbr.rel (%p515) target = $region104
        $region103: #{tpu_custom_call.1} parent=91 // pred_region
          %s518 = sand.u32 %s111, 1
          %s519 = scalar_lea.sflag [#allocation8], %s518
          %s520 = sand.u32 %s111, 1
          %s521 = smul.addr %s520, 32
          %s522 = scalar_lea.vmem [#allocation7], %s521
          %523 = dma.done %s519, 512
        $region104: #{tpu_custom_call.1} parent=91 // pred_fallthru
          _
      $region92: #{tpu_custom_call.1} parent=5 // pred_fallthru
        _
    $region6: #{tpu_custom_call.1} parent=1 // loop_footer
      %s23 = sadd.s32 1, %s19
    $region7: #{tpu_custom_call.1} parent=1 // loop_footer_branch
      %18 = sbr.rel target = $region3
    $region8: #{tpu_custom_call.1} parent=1 // loop_exit
      _
    %524 = vsyncpa [#allocation3], 1
    %s525 = scalar_lea.sflag [#allocation3], 1
    %526 = vsyncpa %s525, 1
    %527 = vsyncpa [#allocation4], 1
    %s528 = scalar_lea.sflag [#allocation4], 1
    %529 = vsyncpa %s528, 1
    %530 = vsyncpa [#allocation8], 1
    %s531 = scalar_lea.sflag [#allocation8], 1
    %532 = vsyncpa %s531, 1

</llo_original>
